<compile_context>
chip_gen: v7x
topology: tpu7x:2x2x1
jax: 0.10.0
libtpu: 0.0.40
codegen_flags: <defaults>
</compile_context>

<pallas_src>
import functools

import jax
import jax.numpy as jnp
from jax.experimental import pallas as pl
from jax.experimental.pallas import tpu as pltpu


_MIB = 1024 * 1024
# Each in/out pipeline buffer should be at least a few MiB: measured on v6e a
# purely mem-bound kernel reaches ~85% of HBM roofline at ~1 MiB blocks and
# ~86% at >=4 MiB, so we aim for ~4 MiB and stop growing past it.
_TARGET_BLOCK_BYTES = 4 * _MIB


def _vmem_budgets():
    """Generation-aware (block-sizing budget bytes, scoped vmem_limit_bytes)."""
    try:
        vmem_bytes = pltpu.get_tpu_info().vmem_capacity_bytes
    except Exception:  # older jax / interpret mode / non-TPU tracing
        vmem_bytes = None
    if vmem_bytes is not None and vmem_bytes <= 64 * _MIB:
        # v7x-class: only 64 MiB VMEM per TensorCore -- leave headroom for the
        # compiler and the in-kernel f32 temporaries.
        return 28 * _MIB, 44 * _MIB
    if vmem_bytes is None:
        # Unknown chip: conservative budget that fits every generation.
        return 20 * _MIB, 32 * _MIB
    # v5e / v6e: 128 MiB physical VMEM; raise the default scoped limit.
    return 56 * _MIB, 88 * _MIB


def _plan_tiling(N, C, HW, itemsize, budget_bytes,
                 target_bytes=_TARGET_BLOCK_BYTES):
    """Returns ("batch", tile_n, HW) or ("spatial", 1, tile_hw)."""
    # VMEM cost per block element: 4 pipeline buffers (in + out, double
    # buffered) in the input dtype plus ~8 B of f32 temporaries (x.astype(f32)
    # and its square) materialized inside the kernel.
    bytes_per_elem = 4 * itemsize + 8
    max_block_elems = max(budget_bytes // bytes_per_elem, C * 128)
    per_image_elems = C * HW

    if N >= 2 and per_image_elems <= max_block_elems:
        # Batch tiling: several whole images per block -> one large contiguous
        # DMA per grid step and fewer grid steps.
        per_image_bytes = per_image_elems * itemsize
        tile_n = min(N,
                     max_block_elems // per_image_elems,
                     max(1, -(-target_bytes // per_image_bytes)))
        # Keep at least two grid steps so both v7x TensorCores get work.
        tile_n = max(1, min(tile_n, -(-N // 2)))
        return "batch", tile_n, HW

    # Spatial tiling: channels stay whole on the sublane axis, tile the lane
    # (HW) axis in multiples of 128 (or take it whole).
    lane_budget = max_block_elems // C
    if HW <= max(lane_budget, 128):
        tile_hw = HW
        if N == 1 and HW >= 256:
            # Single image, one tile -> split HW so the grid has >=2 steps.
            tile_hw = max(128, -(-(HW // 2) // 128) * 128)
    else:
        target_lanes = -(-target_bytes // (C * itemsize))
        tile_hw = min(lane_budget, max(target_lanes, 128))
        tile_hw = max(128, (tile_hw // 128) * 128)
    return "spatial", 1, tile_hw


def _pixel_norm_kernel_spatial(x_ref, o_ref, *, epsilon):
    # Block: (C, TILE_HW) -- channels on sublanes, spatial on lanes.
    xf = x_ref[...].astype(jnp.float32)
    mean = jnp.mean(xf * xf, axis=0, keepdims=True)       # XLU sublane reduce
    inv = jax.lax.rsqrt(mean + jnp.float32(epsilon))       # EUP rsqrt
    o_ref[...] = (xf * inv).astype(o_ref.dtype)            # single downcast


def _pixel_norm_kernel_batch(x_ref, o_ref, *, epsilon):
    # Block: (TILE_N, C, HW) -- whole images; reduce over channels (axis=1).
    xf = x_ref[...].astype(jnp.float32)
    mean = jnp.mean(xf * xf, axis=1, keepdims=True)
    inv = jax.lax.rsqrt(mean + jnp.float32(epsilon))
    o_ref[...] = (xf * inv).astype(o_ref.dtype)


def pixel_norm(x, epsilon=1e-8):
    """x: (N, C, H, W) -> (N, C, H, W); matches torch Pixel_Norm.forward."""
    N, C, H, W = x.shape
    HW = H * W
    x3 = x.reshape(N, C, HW)

    itemsize = jnp.dtype(x.dtype).itemsize
    budget_bytes, vmem_limit_bytes = _vmem_budgets()
    mode, tile_n, tile_hw = _plan_tiling(N, C, HW, itemsize, budget_bytes)

    if mode == "batch":
        kernel = functools.partial(_pixel_norm_kernel_batch, epsilon=epsilon)
        grid = (pl.cdiv(N, tile_n),)
        block = (tile_n, C, HW)
        index_map = lambda b: (b, 0, 0)
        semantics = ("parallel",)
    else:
        kernel = functools.partial(_pixel_norm_kernel_spatial, epsilon=epsilon)
        grid = (N, pl.cdiv(HW, tile_hw))
        block = (pl.Squeezed(), C, tile_hw)
        index_map = lambda b, t: (b, 0, t)
        semantics = ("parallel", "parallel")

    out3 = pl.pallas_call(
        kernel,
        out_shape=jax.ShapeDtypeStruct((N, C, HW), x.dtype),
        grid_spec=pltpu.PrefetchScalarGridSpec(
            num_scalar_prefetch=0,
            grid=grid,
            in_specs=[pl.BlockSpec(block, index_map)],
            out_specs=pl.BlockSpec(block, index_map),
        ),
        compiler_params=pltpu.CompilerParams(
            dimension_semantics=semantics,
            vmem_limit_bytes=vmem_limit_bytes,
        ),
    )(x3)

    return out3.reshape(N, C, H, W)


def _reference(x, epsilon):
    return x * jax.lax.rsqrt(
        jnp.mean(x * x, axis=1, keepdims=True) + jnp.float32(epsilon))


if __name__ == "__main__":
    key = jax.random.PRNGKey(0)
    k0, k1 = jax.random.split(key)

    # Batch-tiled path (N >= 2, whole images per block).
    x0 = jax.random.normal(k0, (2, 4, 16, 16), dtype=jnp.float32)
    out0 = jax.block_until_ready(pixel_norm(x0, epsilon=1e-8))
    assert out0.shape == x0.shape
    assert jnp.allclose(out0, _reference(x0, 1e-8), atol=1e-5, rtol=1e-5)

    # Spatial-tiled path (N == 1 forces the HW-tiled branch, split into 2 tiles).
    x1 = jax.random.normal(k1, (1, 4, 16, 16), dtype=jnp.float32)
    out1 = jax.block_until_ready(pixel_norm(x1, epsilon=1e-8))
    assert out1.shape == x1.shape
    assert jnp.allclose(out1, _reference(x1, 1e-8), atol=1e-5, rtol=1e-5)

    print("KERNEL_OK")
</pallas_src>

<mosaic_0001>
module attributes {stable_mosaic.version = 11 : i64} {
  func.func @_pixel_norm_kernel_batch(%arg0: i32, %arg1: memref<1x4x256xf32, #tpu.memory_space<vmem>>, %arg2: memref<1x4x256xf32, #tpu.memory_space<vmem>>) attributes {dimension_semantics = [#tpu.dimension_semantics<parallel>], iteration_bounds = array<i64: 2>, scalar_prefetch = 0 : i64, scratch_operands = 0 : i64, tpu.core_type = #tpu.core_type<tc>, window_params = [{transform_indices = @transform_0, window_bounds = array<i64: 1, 4, 256>}, {transform_indices = @transform_1, window_bounds = array<i64: 1, 4, 256>}]} {
    %c0 = arith.constant 0 : index
    %c0_0 = arith.constant 0 : index
    %c0_1 = arith.constant 0 : index
    %0 = vector.load %arg1[%c0, %c0_0, %c0_1] : memref<1x4x256xf32, #tpu.memory_space<vmem>>, vector<1x4x256xf32>
    %1 = arith.mulf %0, %0 : vector<1x4x256xf32>
    %cst = arith.constant dense<0.000000e+00> : vector<1x256xf32>
    %2 = vector.multi_reduction <add>, %1, %cst [1] : vector<1x4x256xf32> to vector<1x256xf32>
    %3 = vector.shape_cast %2 : vector<1x256xf32> to vector<1x1x256xf32>
    %cst_2 = arith.constant 4.000000e+00 : f32
    %4 = vector.broadcast %cst_2 : f32 to vector<1x1x256xf32>
    %5 = arith.divf %3, %4 : vector<1x1x256xf32>
    %cst_3 = arith.constant 9.99999993E-9 : f32
    %6 = vector.broadcast %cst_3 : f32 to vector<1x1x256xf32>
    %7 = arith.addf %5, %6 : vector<1x1x256xf32>
    %8 = math.rsqrt %7 : vector<1x1x256xf32>
    %9 = vector.broadcast %8 : vector<1x1x256xf32> to vector<1x4x256xf32>
    %10 = arith.mulf %0, %9 : vector<1x4x256xf32>
    %c0_4 = arith.constant 0 : index
    %c0_5 = arith.constant 0 : index
    %c0_6 = arith.constant 0 : index
    %11 = vector.load %arg2[%c0_4, %c0_5, %c0_6] : memref<1x4x256xf32, #tpu.memory_space<vmem>>, vector<1x4x256xf32>
    tpu.vector_store %arg2[%c0_4, %c0_5, %c0_6], %10 {strides = array<i32>} : memref<1x4x256xf32, #tpu.memory_space<vmem>>, vector<1x4x256xf32>,
    return
  }
  func.func @transform_0(%arg0: i32) -> (i32, i32, i32) {
    %c0_i32 = arith.constant 0 : i32
    %c0_i32_0 = arith.constant 0 : i32
    %c0_i32_1 = arith.constant 0 : i32
    return %arg0, %c0_i32, %c0_i32_0 : i32, i32, i32
  }
  func.func @transform_1(%arg0: i32) -> (i32, i32, i32) {
    %c0_i32 = arith.constant 0 : i32
    %c0_i32_0 = arith.constant 0 : i32
    %c0_i32_1 = arith.constant 0 : i32
    return %arg0, %c0_i32, %c0_i32_0 : i32, i32, i32
  }
}

</mosaic_0001>

<llo_original>
// kernel: tpu_custom_call.1
$region0: #{tpu_custom_call.1}
  #allocation0 [shape = 'u32[]', space=smem, size = 0x4, offset = 0x4, fixed_abs, tag = 'smem constant byte address 0x4 - core index']
  #allocation1 [shape = 'u32[144,128]{1,0:T(1,128)}', space=vmem, size = 0x12000, scoped, tag = 'internal scratch']
  %s0 = inlined_call_operand.hbm [shape: f32[2,4,256], index: 0, kind: input, shape index: {}]
  %s1 = inlined_call_operand.hbm [shape: f32[2,4,256], index: 1, kind: output, shape index: {}]
  %s2 = sld [smem:[#allocation0]]
  $region41: #{tpu_custom_call.1} parent=0
    _
  %s4 = ssub.s32 1, %s2
  %s5 = scalar_select 0, %s4, %s2
  $region1: #{tpu_custom_call.1} parent=0
    #allocation2 [shape = 'u8[8192]{0}', space=vmem, size = 0x2000, scoped, tag = 'input window, operand 0']
    #allocation3 [shape = 's32[2]{0}', space=sflag, size = 0x8, scoped, tag = 'scoped memory for tpu_custom_call.1']
    #allocation4 [shape = 's32[2]{0}', space=sflag, size = 0x8, scoped, tag = 'scoped memory for tpu_custom_call.1']
    #allocation5 [shape = 'u8[8192]{0}', space=vmem, size = 0x2000, scoped, tag = 'output window, operand 0']
    %6 = vsyncpa [#allocation3], 0
    %s7 = scalar_lea.sflag [#allocation3], 1
    %8 = vsyncpa %s7, 0
    %9 = vsyncpa [#allocation4], 0
    %s10 = scalar_lea.sflag [#allocation4], 1
    %11 = vsyncpa %s10, 0
    loop: start=0, step=1, limit=4
    $region2: #{tpu_custom_call.1} parent=1 // loop_pre_header
      _
    $region3: #{tpu_custom_call.1} parent=1 // loop_header
      %s13 = sphi 0, %s17
      %p14 = scmp.ge.s32.totalorder %s13, 4
      %s23 = sphi 0, %s25
      %s26 = sphi 0, %s23
      %s27 = sphi 0, %s26
      %s43 = sphi 0, %s27
      %s49 = sphi 0, %s51
      %s52 = sphi 0, %s49
      %s53 = sphi 0, %s52
      %s69 = sphi 0, %s53
    $region4: #{tpu_custom_call.1} parent=1 // loop_header_branch
      %16 = sbr.rel (%p14) target = $region8
    $region5: #{tpu_custom_call.1} parent=1 // loop_body
      %s18 = ssub.s32 %s13, 1
      %s19 = ssub.s32 %s13, 2
      %s20 = sadd.s32 %s13, 1
      %s21 = ssub.s32 %s13, %s20
      %p22 = scmp.eq.s32.totalorder %s21, 0
      %s24 = sadd.s32 %s23, 1
      %s25 = scalar_select %p22, %s23, %s24
      %p28 = pneg %p22
      %p29 = scmp.eq.s32.totalorder %s13, 1
      %p30 = por %p28, %p29
      %p31 = scmp.ne.s32.totalorder %s23, %s26
      %p32 = scmp.eq.s32.totalorder %s13, 0
      %p33 = por %p31, %p32
      %p34 = scmp.ne.s32.totalorder %s23, %s26
      %p35 = scmp.eq.s32.totalorder %s18, 1
      %p36 = por %p34, %p35
      %p37 = scmp.ne.s32.totalorder %s26, %s27
      %p38 = scmp.eq.s32.totalorder %s18, 0
      %p39 = por %p37, %p38
      %p40 = scmp.ne.s32.totalorder %s26, %s27
      %p41 = scmp.eq.s32.totalorder %s19, 1
      %p42 = por %p40, %p41
      %p44 = scmp.ne.s32.totalorder %s27, %s43
      %p45 = scmp.eq.s32.totalorder %s19, 0
      %p46 = por %p44, %p45
      %s47 = ssub.s32 %s13, %s20
      %p48 = scmp.eq.s32.totalorder %s47, 0
      %s50 = sadd.s32 %s49, 1
      %s51 = scalar_select %p48, %s49, %s50
      %p54 = pneg %p48
      %p55 = scmp.eq.s32.totalorder %s13, 1
      %p56 = por %p54, %p55
      %p57 = scmp.ne.s32.totalorder %s49, %s52
      %p58 = scmp.eq.s32.totalorder %s13, 0
      %p59 = por %p57, %p58
      %p60 = scmp.ne.s32.totalorder %s49, %s52
      %p61 = scmp.eq.s32.totalorder %s18, 1
      %p62 = por %p60, %p61
      %p63 = scmp.ne.s32.totalorder %s52, %s53
      %p64 = scmp.eq.s32.totalorder %s18, 0
      %p65 = por %p63, %p64
      %p66 = scmp.ne.s32.totalorder %s52, %s53
      %p67 = scmp.eq.s32.totalorder %s19, 1
      %p68 = por %p66, %p67
      %p70 = scmp.ne.s32.totalorder %s53, %s69
      %p71 = scmp.eq.s32.totalorder %s19, 0
      %p72 = por %p70, %p71
      %p73 = scmp.le.s32.totalorder 1, %s13
      %p74 = scmp.lt.s32.totalorder %s13, 3
      %p75 = pnand %p73, %p74
      %p76 = pneg %p75
      // Predicated region
      $region9: #{tpu_custom_call.1} parent=5 // pred_check
        _
      $region10: #{tpu_custom_call.1} parent=5 // pred_check_branch
        %78 = sbr.rel (%p75) target = $region12
      $region11: #{tpu_custom_call.1} parent=5 // pred_region
        %s79 = ssub.s32 %s13, 1
      $region12: #{tpu_custom_call.1} parent=5 // pred_fallthru
        _
      %p80 = scmp.lt.s32.totalorder %s13, 2
      // Predicated region
      $region13: #{tpu_custom_call.1} parent=5 // pred_check
        %p81 = pneg %p80
      $region14: #{tpu_custom_call.1} parent=5 // pred_check_branch
        %83 = sbr.rel (%p81) target = $region16
      $region15: #{tpu_custom_call.1} parent=5 // pred_region
        // Predicated region
        $region17: #{tpu_custom_call.1} parent=15 // pred_check
          %p84 = pneg %p33
        $region18: #{tpu_custom_call.1} parent=15 // pred_check_branch
          %86 = sbr.rel (%p84) target = $region20
        $region19: #{tpu_custom_call.1} parent=15 // pred_region
          %s87 = sand.u32 %s23, 1
          %s88 = scalar_lea.sflag [#allocation3], %s87
          %s89 = sand.u32 %s23, 1
          %s90 = smul.addr %s89, 8
          %s91 = scalar_lea.vmem [#allocation2], %s90
          %s93 = ssub.s32 128, 128
          %94 = vsyncadd %s88, %s93
          %s95 = smul.addr %s13, 2
          %s96 = smul.addr %s95, 64
          %s97 = scalar_lea.hbm %s0, %s96
          %s99 = sshll.u32 %s91, 4
          %s100 = int_to_ptr.vmem [resolvable:$true] %s99
          %102 = dma.hbm_to_vmem [thread:$0]  %s97, 128, %s100, %s88
        $region20: #{tpu_custom_call.1} parent=15 // pred_fallthru
          _
      $region16: #{tpu_custom_call.1} parent=5 // pred_fallthru
        _
      %p103 = scmp.le.s32.totalorder 1, %s13
      %p104 = scmp.lt.s32.totalorder %s13, 3
      %p105 = pnand %p103, %p104
      %p106 = pneg %p105
      // Predicated region
      $region21: #{tpu_custom_call.1} parent=5 // pred_check
        _
      $region22: #{tpu_custom_call.1} parent=5 // pred_check_branch
        %108 = sbr.rel (%p105) target = $region24
      $region23: #{tpu_custom_call.1} parent=5 // pred_region
        %s109 = ssub.s32 %s13, 1
        %s110 = sand.u32 %s26, 1
        %s111 = scalar_lea.sflag [#allocation3], %s110
        %s112 = sand.u32 %s26, 1
        %s113 = smul.addr %s112, 8
        %s114 = scalar_lea.vmem [#allocation2], %s113
        // Predicated region
        $region25: #{tpu_custom_call.1} parent=23 // pred_check
          %p115 = pneg %p39
        $region26: #{tpu_custom_call.1} parent=23 // pred_check_branch
          %117 = sbr.rel (%p115) target = $region28
        $region27: #{tpu_custom_call.1} parent=23 // pred_region
          %118 = dma.done %s111, 128
        $region28: #{tpu_custom_call.1} parent=23 // pred_fallthru
          _
        %s119 = sand.u32 %s26, 1
        %s120 = scalar_lea.sflag [#allocation3], %s119
        %s121 = sand.u32 %s26, 1
        %s122 = smul.addr %s121, 8
        %s123 = scalar_lea.vmem [#allocation2], %s122
        %p124 = pneg %p39
        %p125 = pneg %p36
        %p126 = pneg %p65
        %p127 = pneg %p62
        %s128 = sand.u32 %s52, 1
        %s129 = scalar_lea.sflag [#allocation4], %s128
        %s130 = sand.u32 %s52, 1
        %s131 = smul.addr %s130, 8
        %s132 = scalar_lea.vmem [#allocation5], %s131
        %v133 = vld [vmem:[%s114] sm:$0xff]
        %v134 = vmul.f32 %v133, %v133
        %v136 = vcombine.high %v134, %v134
        %vm138 = vcmask 1043456
        %v139 = vsel %vm138, %v134, 0.0
        %v140 = vrot.slane %v139, 4
        %v141 = vadd.f32 %v139, %v140
        %v142 = vrot.slane %v141, 2
        %v143 = vadd.f32 %v141, %v142
        %v144 = vrot.slane %v143, 1
        %v145 = vadd.f32 %v143, %v144
        %v146 = vsel %vm138, %v136, 0.0
        %v147 = vrot.slane %v146, 4
        %v148 = vadd.f32 %v146, %v147
        %v149 = vrot.slane %v148, 2
        %v150 = vadd.f32 %v148, %v149
        %v151 = vrot.slane %v150, 1
        %v152 = vadd.f32 %v150, %v151
        %v153 = vrcp.pop 4.0
        %v154 = vmul.f32 %v145, %v153
        %v155 = vmul.f32 %v152, %v153
        %v156 = vadd.f32 %v154, 1e-08
        %v157 = vadd.f32 %v155, 1e-08
        %v158 = vrsqrt.pop %v156
        %v159 = vrsqrt.pop %v157
        %v162 = vcombine.low %v158, %v159
        %v164 = vmul.f32 %v133, %v162
        %165 = vst [vmem:[%s132] sm:$0xff] %v164
        %s166 = sand.u32 %s52, 1
        %s167 = scalar_lea.sflag [#allocation4], %s166
        %s168 = sand.u32 %s52, 1
        %s169 = smul.addr %s168, 8
        %s170 = scalar_lea.vmem [#allocation5], %s169
        // Predicated region
        $region29: #{tpu_custom_call.1} parent=23 // pred_check
          %p171 = pneg %p62
        $region30: #{tpu_custom_call.1} parent=23 // pred_check_branch
          %173 = sbr.rel (%p171) target = $region32
        $region31: #{tpu_custom_call.1} parent=23 // pred_region
          %s175 = ssub.s32 128, 128
          %176 = vsyncadd %s167, %s175
          %s177 = smul.addr %s18, 2
          %s178 = smul.addr %s177, 64
          %s179 = scalar_lea.hbm %s1, %s178
          %s181 = sshll.u32 %s170, 4
          %s182 = int_to_ptr.vmem [resolvable:$true] %s181
          %184 = dma.vmem_to_hbm [thread:$0]  %s182, 128, %s179, %s167
        $region32: #{tpu_custom_call.1} parent=23 // pred_fallthru
          _
      $region24: #{tpu_custom_call.1} parent=5 // pred_fallthru
        _
      %p185 = scmp.le.s32.totalorder 2, %s13
      // Predicated region
      $region33: #{tpu_custom_call.1} parent=5 // pred_check
        %p186 = pneg %p185
      $region34: #{tpu_custom_call.1} parent=5 // pred_check_branch
        %188 = sbr.rel (%p186) target = $region36
      $region35: #{tpu_custom_call.1} parent=5 // pred_region
        %s189 = ssub.s32 %s13, 2
        // Predicated region
        $region37: #{tpu_custom_call.1} parent=35 // pred_check
          %p190 = pneg %p68
        $region38: #{tpu_custom_call.1} parent=35 // pred_check_branch
          %192 = sbr.rel (%p190) target = $region40
        $region39: #{tpu_custom_call.1} parent=35 // pred_region
          %s193 = sand.u32 %s53, 1
          %s194 = scalar_lea.sflag [#allocation4], %s193
          %s195 = sand.u32 %s53, 1
          %s196 = smul.addr %s195, 8
          %s197 = scalar_lea.vmem [#allocation5], %s196
          %198 = dma.done %s194, 128
        $region40: #{tpu_custom_call.1} parent=35 // pred_fallthru
          _
      $region36: #{tpu_custom_call.1} parent=5 // pred_fallthru
        _
    $region6: #{tpu_custom_call.1} parent=1 // loop_footer
      %s17 = sadd.s32 1, %s13
    $region7: #{tpu_custom_call.1} parent=1 // loop_footer_branch
      %12 = sbr.rel target = $region3
    $region8: #{tpu_custom_call.1} parent=1 // loop_exit
      _
    %199 = vsyncpa [#allocation3], 1
    %s200 = scalar_lea.sflag [#allocation3], 1
    %201 = vsyncpa %s200, 1
    %202 = vsyncpa [#allocation4], 1
    %s203 = scalar_lea.sflag [#allocation4], 1
    %204 = vsyncpa %s203, 1

</llo_original>
